<compile_context>
chip_gen: v7x
topology: tpu7x:2x2x1
jax: 0.10.0
libtpu: 0.0.40
codegen_flags: <defaults>
</compile_context>

<pallas_src>
import functools

import jax
import jax.numpy as jnp
from jax.experimental import pallas as pl
from jax.experimental.pallas import tpu as pltpu

_LANE = 128


def mlp_kernel(xT_ref, w1t_ref, b1_ref, w2t_ref, b2_ref, wo_ref, bo_ref, o_ref):
    # x is feature-major: (F, tb), batch on the lane axis.
    xT = xT_ref[...]

    # layer_1 + ReLU (MXU matmul, f32 accumulate; bias/ReLU in f32 on the VPU).
    h1 = jnp.dot(w1t_ref[...], xT, preferred_element_type=jnp.float32)      # (H, tb)
    h1 = jnp.maximum(h1 + b1_ref[...], 0.0)

    # BatchNorm1 is folded into (w2t, b2) on the host.
    # layer_2 + ReLU.
    h2 = jnp.dot(w2t_ref[...], h1.astype(w2t_ref.dtype),
                 preferred_element_type=jnp.float32)                         # (H, tb)
    h2 = jnp.maximum(h2 + b2_ref[...], 0.0)

    # BatchNorm2 folded into (wo, bo); dropout(p=0.1) -> identity in eval mode.
    # layer_out (N=1): VPU multiply + sublane reduce -> lane-dense (1, tb) row.
    out = jnp.sum(h2 * wo_ref[...], axis=0, keepdims=True) + bo_ref[...]     # (1, tb)
    o_ref[...] = out.astype(o_ref.dtype)


def _choose_tb(batch, cap=4096):
    """Static batch-tile choice (shapes are static under jit)."""
    if batch <= 512:
        # Overhead-dominated regime: one full-extent step (no padding needed,
        # full-array blocks are exempt from the (8,128) divisibility rule).
        return batch
    # >=2 steps so both v7x TensorCores get work; each step as big as possible
    # (multiple of 128 lanes), capped so VMEM stays comfortable even on v7x.
    per_core = (batch + 1) // 2
    tb = ((per_core + _LANE - 1) // _LANE) * _LANE
    return min(tb, cap)


@functools.partial(jax.jit, static_argnames=("tb",))
def linear_forward(x, params, *, tb=None):
    """x: (B, F) float32 -> (B, 1) float32 (eval-mode forward)."""
    w1t, b1, w2t, b2, wo_col, bo = params
    B, F = x.shape
    H = w1t.shape[0]
    if tb is None:
        tb = _choose_tb(B)
    n_blocks = (B + tb - 1) // tb

    # Feature-major relayout + compute-dtype cast (fuses into one XLA pass over
    # x).  If x is produced already transposed / bf16 upstream, pass it through.
    xT = x.T.astype(w1t.dtype)                                               # (F, B)

    itm = jnp.dtype(w1t.dtype).itemsize
    flops = 2 * B * (F * H + H * H + H)
    bytes_accessed = (B * F * itm + 4 * B                  # x in, out
                      + (F * H + H * H + H) * itm          # w1, w2, wo
                      + 4 * (2 * H + 1))                   # biases

    def const_spec(a):
        return pl.BlockSpec(a.shape, lambda i: (0,) * a.ndim)

    out = pl.pallas_call(
        mlp_kernel,
        out_shape=jax.ShapeDtypeStruct((1, B), jnp.float32),
        grid_spec=pl.GridSpec(
            grid=(n_blocks,),
            in_specs=[
                # x tile streams over the batch (lane) axis; ragged tails are
                # masked by Pallas and each output column only sees its own
                # input column, so masked garbage cannot leak into valid rows.
                pl.BlockSpec((F, tb), lambda i: (0, i)),
                const_spec(w1t), const_spec(b1),          # weights stay VMEM-resident
                const_spec(w2t), const_spec(b2),
                const_spec(wo_col), const_spec(bo),
            ],
            out_specs=pl.BlockSpec((1, tb), lambda i: (0, i)),   # lane-dense row
        ),
        compiler_params=pltpu.CompilerParams(
            dimension_semantics=("parallel",)),
        cost_estimate=pl.CostEstimate(
            flops=flops, transcendentals=0, bytes_accessed=bytes_accessed),
    )(xT, w1t, b1, w2t, b2, wo_col, bo)

    return out.reshape(B, 1)


def init_raw_params(key, in_features, hidden=64):
    """PyTorch-equivalent raw parameters (weights stored (in, out))."""
    ks = jax.random.split(key, 10)
    w1 = jax.random.normal(ks[0], (in_features, hidden), jnp.float32) * 0.1
    b1 = jax.random.normal(ks[1], (1, hidden), jnp.float32) * 0.1
    w2 = jax.random.normal(ks[2], (hidden, hidden), jnp.float32) * 0.1
    b2 = jax.random.normal(ks[3], (1, hidden), jnp.float32) * 0.1
    wo = jax.random.normal(ks[4], (hidden, 1), jnp.float32) * 0.1
    bo = jax.random.normal(ks[5], (1, 1), jnp.float32) * 0.1

    eps = 1e-5
    gamma1 = jnp.ones((hidden,), jnp.float32)
    beta1 = jnp.zeros((hidden,), jnp.float32)
    mean1 = jax.random.normal(ks[6], (hidden,), jnp.float32) * 0.05
    var1 = jnp.abs(jax.random.normal(ks[7], (hidden,), jnp.float32)) * 0.1 + 1.0
    s1 = gamma1 / jnp.sqrt(var1 + eps)
    t1 = beta1 - mean1 * s1

    gamma2 = jnp.ones((hidden,), jnp.float32)
    beta2 = jnp.zeros((hidden,), jnp.float32)
    mean2 = jax.random.normal(ks[8], (hidden,), jnp.float32) * 0.05
    var2 = jnp.abs(jax.random.normal(ks[9], (hidden,), jnp.float32)) * 0.1 + 1.0
    s2 = gamma2 / jnp.sqrt(var2 + eps)
    t2 = beta2 - mean2 * s2

    return dict(w1=w1, b1=b1, w2=w2, b2=b2, wo=wo, bo=bo,
                s1=s1, t1=t1, s2=s2, t2=t2)


def fold_params(raw, compute_dtype=jnp.bfloat16):
    """Fold BN1 into (w2,b2), BN2 into (wo,bo) and transpose to feature-major.

    Returns (w1t, b1_col, w2t, b2_col, wo_col, bo): matmul weights in
    `compute_dtype` (MXU inputs), biases and the output weight column in f32
    (VPU side).
    """
    s1, t1 = raw["s1"], raw["t1"]
    s2, t2 = raw["s2"], raw["t2"]

    w1t = raw["w1"].T                                          # (H, F)
    b1_col = raw["b1"].T                                       # (H, 1)

    w2f = s1.reshape(-1, 1) * raw["w2"]                        # (H, H)
    w2t = w2f.T                                                # (H, H)
    b2_col = (raw["b2"] + t1.reshape(1, -1) @ raw["w2"]).T     # (H, 1)

    wo_col = s2.reshape(-1, 1) * raw["wo"]                     # (H, 1), stays f32 (VPU)
    bo_col = raw["bo"] + t2.reshape(1, -1) @ raw["wo"]         # (1, 1)

    return (w1t.astype(compute_dtype), b1_col,
            w2t.astype(compute_dtype), b2_col,
            wo_col, bo_col)


def reference_forward(x, raw):
    """Un-folded f32 reference matching the PyTorch eval-mode forward."""
    h = jnp.maximum(x @ raw["w1"] + raw["b1"], 0.0)
    h = h * raw["s1"].reshape(1, -1) + raw["t1"].reshape(1, -1)
    h = jnp.maximum(h @ raw["w2"] + raw["b2"], 0.0)
    h = h * raw["s2"].reshape(1, -1) + raw["t2"].reshape(1, -1)
    return h @ raw["wo"] + raw["bo"]


if __name__ == "__main__":
    key = jax.random.PRNGKey(0)
    k_x, k_p = jax.random.split(key)

    B, F, H = 256, 8, 64      # input_size = len(inputs) = 8, hidden = 64
    x = jax.random.normal(k_x, (B, F), jnp.float32)

    raw = init_raw_params(k_p, F, hidden=H)
    params = fold_params(raw, compute_dtype=jnp.bfloat16)

    ref = reference_forward(x, raw)

    # Default path: single full-extent grid step (B=256 is overhead-dominated).
    out = jax.block_until_ready(linear_forward(x, params))
    assert out.shape == (B, 1)
    assert jnp.allclose(out, ref, atol=3e-2, rtol=3e-2), (
        f"mismatch vs reference (max abs err {jnp.max(jnp.abs(out - ref))})")

    # Explicitly-tiled path: grid=(2,), exercises the batch-streaming index map
    # (what large B / the v7x two-TensorCore split uses).
    out2 = jax.block_until_ready(linear_forward(x, params, tb=128))
    assert jnp.allclose(out2, ref, atol=3e-2, rtol=3e-2), "tiled-path mismatch"

    print("KERNEL_OK")
</pallas_src>

<mosaic_0001>
module attributes {stable_mosaic.version = 11 : i64} {
  func.func @mlp_kernel(%arg0: i32, %arg1: memref<8x256xbf16, #tpu.memory_space<vmem>>, %arg2: memref<64x8xbf16, #tpu.memory_space<vmem>>, %arg3: memref<64x1xf32, #tpu.memory_space<vmem>>, %arg4: memref<64x64xbf16, #tpu.memory_space<vmem>>, %arg5: memref<64x1xf32, #tpu.memory_space<vmem>>, %arg6: memref<64x1xf32, #tpu.memory_space<vmem>>, %arg7: memref<1x1xf32, #tpu.memory_space<vmem>>, %arg8: memref<1x256xf32, #tpu.memory_space<vmem>>) attributes {dimension_semantics = [#tpu.dimension_semantics<parallel>], iteration_bounds = array<i64: 1>, scalar_prefetch = 0 : i64, scratch_operands = 0 : i64, tpu.core_type = #tpu.core_type<tc>, window_params = [{transform_indices = @transform_0, window_bounds = array<i64: 8, 256>}, {pipeline_mode = #tpu.pipeline_mode<synchronous>, transform_indices = @transform_1, window_bounds = array<i64: 64, 8>}, {pipeline_mode = #tpu.pipeline_mode<synchronous>, transform_indices = @transform_2, window_bounds = array<i64: 64, 1>}, {pipeline_mode = #tpu.pipeline_mode<synchronous>, transform_indices = @transform_3, window_bounds = array<i64: 64, 64>}, {pipeline_mode = #tpu.pipeline_mode<synchronous>, transform_indices = @transform_4, window_bounds = array<i64: 64, 1>}, {pipeline_mode = #tpu.pipeline_mode<synchronous>, transform_indices = @transform_5, window_bounds = array<i64: 64, 1>}, {pipeline_mode = #tpu.pipeline_mode<synchronous>, transform_indices = @transform_6, window_bounds = array<i64: 1, 1>}, {transform_indices = @transform_7, window_bounds = array<i64: 1, 256>}]} {
    %c0 = arith.constant 0 : index
    %c0_0 = arith.constant 0 : index
    %0 = vector.load %arg1[%c0, %c0_0] : memref<8x256xbf16, #tpu.memory_space<vmem>>, vector<8x256xbf16>
    %c0_1 = arith.constant 0 : index
    %c0_2 = arith.constant 0 : index
    %1 = vector.load %arg2[%c0_1, %c0_2] : memref<64x8xbf16, #tpu.memory_space<vmem>>, vector<64x8xbf16>
    %cst = arith.constant dense<0.000000e+00> : vector<64x256xf32>
    %2 = tpu.matmul %1, %0, %cst {dimension_numbers = #tpu.dot_dimension_numbers<[1], [0], [0], [1], [0, 0, 1, 1], [], []>} : vector<64x8xbf16>, vector<8x256xbf16>, vector<64x256xf32> -> vector<64x256xf32>
    %c0_3 = arith.constant 0 : index
    %c0_4 = arith.constant 0 : index
    %3 = vector.load %arg3[%c0_3, %c0_4] : memref<64x1xf32, #tpu.memory_space<vmem>>, vector<64x1xf32>
    %4 = vector.broadcast %3 : vector<64x1xf32> to vector<64x256xf32>
    %5 = arith.addf %2, %4 : vector<64x256xf32>
    %cst_5 = arith.constant 0.000000e+00 : f32
    %6 = vector.broadcast %cst_5 : f32 to vector<64x256xf32>
    %7 = arith.maximumf %5, %6 : vector<64x256xf32>
    %c0_6 = arith.constant 0 : index
    %c0_7 = arith.constant 0 : index
    %8 = vector.load %arg4[%c0_6, %c0_7] : memref<64x64xbf16, #tpu.memory_space<vmem>>, vector<64x64xbf16>
    %9 = arith.truncf %7 : vector<64x256xf32> to vector<64x256xbf16>
    %cst_8 = arith.constant dense<0.000000e+00> : vector<64x256xf32>
    %10 = tpu.matmul %8, %9, %cst_8 {dimension_numbers = #tpu.dot_dimension_numbers<[1], [0], [0], [1], [0, 0, 1, 1], [], []>} : vector<64x64xbf16>, vector<64x256xbf16>, vector<64x256xf32> -> vector<64x256xf32>
    %c0_9 = arith.constant 0 : index
    %c0_10 = arith.constant 0 : index
    %11 = vector.load %arg5[%c0_9, %c0_10] : memref<64x1xf32, #tpu.memory_space<vmem>>, vector<64x1xf32>
    %12 = vector.broadcast %11 : vector<64x1xf32> to vector<64x256xf32>
    %13 = arith.addf %10, %12 : vector<64x256xf32>
    %cst_11 = arith.constant 0.000000e+00 : f32
    %14 = vector.broadcast %cst_11 : f32 to vector<64x256xf32>
    %15 = arith.maximumf %13, %14 : vector<64x256xf32>
    %c0_12 = arith.constant 0 : index
    %c0_13 = arith.constant 0 : index
    %16 = vector.load %arg6[%c0_12, %c0_13] : memref<64x1xf32, #tpu.memory_space<vmem>>, vector<64x1xf32>
    %17 = vector.broadcast %16 : vector<64x1xf32> to vector<64x256xf32>
    %18 = arith.mulf %15, %17 : vector<64x256xf32>
    %cst_14 = arith.constant dense<0.000000e+00> : vector<256xf32>
    %19 = vector.multi_reduction <add>, %18, %cst_14 [0] : vector<64x256xf32> to vector<256xf32>
    %20 = vector.shape_cast %19 : vector<256xf32> to vector<1x256xf32>
    %c0_15 = arith.constant 0 : index
    %c0_16 = arith.constant 0 : index
    %21 = vector.load %arg7[%c0_15, %c0_16] : memref<1x1xf32, #tpu.memory_space<vmem>>, vector<1x1xf32>
    %22 = vector.broadcast %21 : vector<1x1xf32> to vector<1x256xf32>
    %23 = arith.addf %20, %22 : vector<1x256xf32>
    %c0_17 = arith.constant 0 : index
    %c0_18 = arith.constant 0 : index
    %24 = vector.load %arg8[%c0_17, %c0_18] : memref<1x256xf32, #tpu.memory_space<vmem>>, vector<1x256xf32>
    tpu.vector_store %arg8[%c0_17, %c0_18], %23 {strides = array<i32>} : memref<1x256xf32, #tpu.memory_space<vmem>>, vector<1x256xf32>,
    return
  }
  func.func @transform_0(%arg0: i32) -> (i32, i32) {
    %c0_i32 = arith.constant 0 : i32
    %c0_i32_0 = arith.constant 0 : i32
    return %c0_i32, %arg0 : i32, i32
  }
  func.func @transform_1(%arg0: i32) -> (i32, i32) {
    %c0_i32 = arith.constant 0 : i32
    %c0_i32_0 = arith.constant 0 : i32
    %c0_i32_1 = arith.constant 0 : i32
    return %c0_i32, %c0_i32_0 : i32, i32
  }
  func.func @transform_2(%arg0: i32) -> (i32, i32) {
    %c0_i32 = arith.constant 0 : i32
    %c0_i32_0 = arith.constant 0 : i32
    %c0_i32_1 = arith.constant 0 : i32
    return %c0_i32, %c0_i32_0 : i32, i32
  }
  func.func @transform_3(%arg0: i32) -> (i32, i32) {
    %c0_i32 = arith.constant 0 : i32
    %c0_i32_0 = arith.constant 0 : i32
    %c0_i32_1 = arith.constant 0 : i32
    return %c0_i32, %c0_i32_0 : i32, i32
  }
  func.func @transform_4(%arg0: i32) -> (i32, i32) {
    %c0_i32 = arith.constant 0 : i32
    %c0_i32_0 = arith.constant 0 : i32
    %c0_i32_1 = arith.constant 0 : i32
    return %c0_i32, %c0_i32_0 : i32, i32
  }
  func.func @transform_5(%arg0: i32) -> (i32, i32) {
    %c0_i32 = arith.constant 0 : i32
    %c0_i32_0 = arith.constant 0 : i32
    %c0_i32_1 = arith.constant 0 : i32
    return %c0_i32, %c0_i32_0 : i32, i32
  }
  func.func @transform_6(%arg0: i32) -> (i32, i32) {
    %c0_i32 = arith.constant 0 : i32
    %c0_i32_0 = arith.constant 0 : i32
    %c0_i32_1 = arith.constant 0 : i32
    return %c0_i32, %c0_i32_0 : i32, i32
  }
  func.func @transform_7(%arg0: i32) -> (i32, i32) {
    %c0_i32 = arith.constant 0 : i32
    %c0_i32_0 = arith.constant 0 : i32
    return %c0_i32, %arg0 : i32, i32
  }
}

</mosaic_0001>

<llo_original>
// kernel: linear_forward.1
$region0: #{linear_forward.1}
  #allocation0 [shape = 'u32[]', space=smem, size = 0x4, offset = 0x4, fixed_abs, tag = 'smem constant byte address 0x4 - core index']
  #allocation1 [shape = 'u32[144,128]{1,0:T(1,128)}', space=vmem, size = 0x12000, scoped, tag = 'internal scratch']
  #allocation2 [shape = 'f32[1,1]{1,0:T(1,128)S(1)}', space=vmem, size = 0x200, scoped, tag = 'scoped memory for linear_forward.1']
  %s0 = inlined_call_operand.vmem [shape: bf16[8,256], index: 0, kind: input, shape index: {}]
  %s1 = inlined_call_operand.vmem [shape: bf16[64,8], index: 1, kind: input, shape index: {}]
  %s2 = inlined_call_operand.vmem [shape: f32[64,1], index: 2, kind: input, shape index: {}]
  %s3 = inlined_call_operand.vmem [shape: bf16[64,64], index: 3, kind: input, shape index: {}]
  %s4 = inlined_call_operand.vmem [shape: f32[64,1], index: 4, kind: input, shape index: {}]
  %s5 = inlined_call_operand.vmem [shape: f32[64,1], index: 5, kind: input, shape index: {}]
  %s6 = inlined_call_operand.<no memory space> [shape: f32[1,1], index: 6, kind: input, shape index: {}]
  %s7 = inlined_call_operand.hbm [shape: f32[1,256], index: 7, kind: output, shape index: {}]
  %s8 = sld [smem:[#allocation0]]
  $region38: #{linear_forward.1} parent=0
    _
  %s10 = ssub.s32 1, %s8
  %s11 = scalar_select 0, %s10, %s8
  %v12 = vstv %s6
  %13 = vst [vmem:[#allocation2] sm:$0x1] %v12
  $region1: #{linear_forward.1} parent=0
    #allocation3 [shape = 'u8[1024]{0}', space=vmem, size = 0x400, scoped, tag = 'output window, operand 0, single buffered']
    #allocation4 [shape = 's32[1]{0}', space=sflag, size = 0x4, scoped, tag = 'scoped memory for linear_forward.1']
    %14 = vsyncpa [#allocation4], 0
    // Predicated region
    $region2: #{linear_forward.1} parent=1 // pred_check
      _
    $region3: #{linear_forward.1} parent=1 // pred_check_branch
      %16 = sbr.rel (0) target = $region5
    $region4: #{linear_forward.1} parent=1 // pred_region
      _
    $region5: #{linear_forward.1} parent=1 // pred_fallthru
      _
    // Predicated region
    $region6: #{linear_forward.1} parent=1 // pred_check
      _
    $region7: #{linear_forward.1} parent=1 // pred_check_branch
      %18 = sbr.rel (0) target = $region9
    $region8: #{linear_forward.1} parent=1 // pred_region
      _
    $region9: #{linear_forward.1} parent=1 // pred_fallthru
      _
    // Predicated region
    $region10: #{linear_forward.1} parent=1 // pred_check
      _
    $region11: #{linear_forward.1} parent=1 // pred_check_branch
      %20 = sbr.rel (0) target = $region13
    $region12: #{linear_forward.1} parent=1 // pred_region
      _
    $region13: #{linear_forward.1} parent=1 // pred_fallthru
      _
    // Predicated region
    $region14: #{linear_forward.1} parent=1 // pred_check
      _
    $region15: #{linear_forward.1} parent=1 // pred_check_branch
      %22 = sbr.rel (0) target = $region17
    $region16: #{linear_forward.1} parent=1 // pred_region
      _
    $region17: #{linear_forward.1} parent=1 // pred_fallthru
      _
    // Predicated region
    $region18: #{linear_forward.1} parent=1 // pred_check
      _
    $region19: #{linear_forward.1} parent=1 // pred_check_branch
      %24 = sbr.rel (0) target = $region21
    $region20: #{linear_forward.1} parent=1 // pred_region
      _
    $region21: #{linear_forward.1} parent=1 // pred_fallthru
      _
    // Predicated region
    $region22: #{linear_forward.1} parent=1 // pred_check
      _
    $region23: #{linear_forward.1} parent=1 // pred_check_branch
      %26 = sbr.rel (0) target = $region25
    $region24: #{linear_forward.1} parent=1 // pred_region
      _
    $region25: #{linear_forward.1} parent=1 // pred_fallthru
      _
    // Predicated region
    $region26: #{linear_forward.1} parent=1 // pred_check
      _
    $region27: #{linear_forward.1} parent=1 // pred_check_branch
      %28 = sbr.rel (0) target = $region29
    $region28: #{linear_forward.1} parent=1 // pred_region
      _
    $region29: #{linear_forward.1} parent=1 // pred_fallthru
      _
    %v30 = vld [vmem:[%s0] sm:$0xff]
    %v31 = vld [vmem:[%s1] sm:$0xf]
    %v32 = vld [vmem:[%s1 + $0x4] sm:$0xf]
    %v33 = vld [vmem:[%s1 + $0x8] sm:$0xf]
    %v34 = vld [vmem:[%s1 + $0xc] sm:$0xf]
    %v35 = vld [vmem:[%s1 + $0x10] sm:$0xf]
    %v36 = vld [vmem:[%s1 + $0x14] sm:$0xf]
    %v37 = vld [vmem:[%s1 + $0x18] sm:$0xf]
    %v38 = vld [vmem:[%s1 + $0x1c] sm:$0xf]
    %v39 = vld [vmem:[%s2] sm:$0xff]
    %v40 = vld [vmem:[%s2 + $0x8] sm:$0xff]
    %v41 = vld [vmem:[%s2 + $0x10] sm:$0xff]
    %v42 = vld [vmem:[%s2 + $0x18] sm:$0xff]
    %v43 = vld [vmem:[%s2 + $0x20] sm:$0xff]
    %v44 = vld [vmem:[%s2 + $0x28] sm:$0xff]
    %v45 = vld [vmem:[%s2 + $0x30] sm:$0xff]
    %v46 = vld [vmem:[%s2 + $0x38] sm:$0xff]
    %48 = vset.pattern.permute.xlu0 0
    %49 = vperm.xlu0 %48, %v39
    %v50 = vpop.permute.xlu0 %49
    %53 = vset.pattern.permute.xlu0 0
    %54 = vperm.xlu0 %53, %v40
    %v55 = vpop.permute.xlu0 %54
    %58 = vset.pattern.permute.xlu0 0
    %59 = vperm.xlu0 %58, %v41
    %v60 = vpop.permute.xlu0 %59
    %63 = vset.pattern.permute.xlu0 0
    %64 = vperm.xlu0 %63, %v42
    %v65 = vpop.permute.xlu0 %64
    %68 = vset.pattern.permute.xlu0 0
    %69 = vperm.xlu0 %68, %v43
    %v70 = vpop.permute.xlu0 %69
    %73 = vset.pattern.permute.xlu0 0
    %74 = vperm.xlu0 %73, %v44
    %v75 = vpop.permute.xlu0 %74
    %78 = vset.pattern.permute.xlu0 0
    %79 = vperm.xlu0 %78, %v45
    %v80 = vpop.permute.xlu0 %79
    %83 = vset.pattern.permute.xlu0 0
    %84 = vperm.xlu0 %83, %v46
    %v85 = vpop.permute.xlu0 %84
    %v95 = vunpack.c.l.b16 %v31
    %v96 = vunpack.c.l.b16 %v32
    %v97 = vunpack.c.l.b16 %v33
    %v98 = vunpack.c.l.b16 %v34
    %v99 = vunpack.c.l.b16 %v35
    %v100 = vunpack.c.l.b16 %v36
    %v101 = vunpack.c.l.b16 %v37
    %v102 = vunpack.c.l.b16 %v38
    %v103 = vpack.c.b16 %v96, %v95
    %v104 = vpack.c.b16 %v98, %v97
    %v105 = vpack.c.b16 %v100, %v99
    %v106 = vpack.c.b16 %v102, %v101
    %v108 = vunpack.c.l.b16 %v30
    %v109 = vunpack.c.h.b16 %v30
    %v110 = vpack.c.b16 %v108, %v108
    %v111 = vpack.c.b16 %v109, %v109
    %vm112 = vcmask 64512
    %v114 = vsel %vm112, %v103, 0
    %v117 = vsel %vm112, %v104, 0
    %v120 = vsel %vm112, %v105, 0
    %v123 = vsel %vm112, %v106, 0
    %vm125 = vcmask 1043456
    %v127 = vsel %vm125, %v110, 0
    %v130 = vsel %vm125, %v111, 0
    %132 = vmatprep.subr.bf16.mxu0 %v130
    %133 = vmatpush1.bf16.msra.mxu0 %v127
    %134 = vmatprep.subr.bf16.mxu0 0
    %135 = vmatpush1.bf16.msra.mxu0 0
    %136 = vmatprep.subr.bf16.mxu0 0
    %137 = vmatpush1.bf16.msra.mxu0 0
    %138 = vmatprep.subr.bf16.mxu0 0
    %139 = vmatpush1.bf16.msra.mxu0 0
    %140 = vmatprep.subr.bf16.mxu0 0
    %141 = vmatpush1.bf16.msra.mxu0 0
    %142 = vmatprep.subr.bf16.mxu0 0
    %143 = vmatpush1.bf16.msra.mxu0 0
    %144 = vmatprep.subr.bf16.mxu0 0
    %145 = vmatpush1.bf16.msra.mxu0 0
    %146 = vmatprep.subr.bf16.mxu0 0
    %147 = vmatpush1.bf16.msra.mxu0 0
    %148 = vmatprep.subr.bf16.mxu0 0
    %149 = vmatpush1.bf16.msra.mxu0 0
    %150 = vmatprep.subr.bf16.mxu0 0
    %151 = vmatpush1.bf16.msra.mxu0 0
    %152 = vmatprep.subr.bf16.mxu0 0
    %153 = vmatpush1.bf16.msra.mxu0 0
    %154 = vmatprep.subr.bf16.mxu0 0
    %155 = vmatpush1.bf16.msra.mxu0 0
    %156 = vmatprep.subr.bf16.mxu0 0
    %157 = vmatpush1.bf16.msra.mxu0 0
    %158 = vmatprep.subr.bf16.mxu0 0
    %159 = vmatpush1.bf16.msra.mxu0 0
    %160 = vmatprep.subr.bf16.mxu0 0
    %161 = vmatpush1.bf16.msra.mxu0 0
    %162 = vmatprep.subr.bf16.mxu0 0
    %163 = vmatpush1.bf16.msra.mxu0 0
    %164 = vmatprep.mubr.bf16.mxu0 0
    %165 = vmatmul.mubr.bf16.gmra.mrb[0].mxu0 %v114
    %v166 = vpop.f32.mrb[0].mxu0
    %v167 = vadd.f32 %v50, %v166
    %v168 = vpop.f32.mrb[0].mxu0
    %v169 = vadd.f32 %v50, %v168
    %v170 = vpop.f32.mrb[0].mxu0
    %v171 = vadd.f32 %v55, %v170
    %v172 = vpop.f32.mrb[0].mxu0
    %v173 = vadd.f32 %v55, %v172
    %174 = vmatprep.mubr.bf16.mxu0 0
    %175 = vmatmul.mubr.bf16.gmra.mrb[0].mxu0 %v117
    %v176 = vpop.f32.mrb[0].mxu0
    %v177 = vadd.f32 %v60, %v176
    %v178 = vpop.f32.mrb[0].mxu0
    %v179 = vadd.f32 %v60, %v178
    %v180 = vpop.f32.mrb[0].mxu0
    %v181 = vadd.f32 %v65, %v180
    %v182 = vpop.f32.mrb[0].mxu0
    %v183 = vadd.f32 %v65, %v182
    %184 = vmatprep.mubr.bf16.mxu0 0
    %185 = vmatmul.mubr.bf16.gmra.mrb[0].mxu0 %v120
    %v186 = vpop.f32.mrb[0].mxu0
    %v187 = vadd.f32 %v70, %v186
    %v188 = vpop.f32.mrb[0].mxu0
    %v189 = vadd.f32 %v70, %v188
    %v190 = vpop.f32.mrb[0].mxu0
    %v191 = vadd.f32 %v75, %v190
    %v192 = vpop.f32.mrb[0].mxu0
    %v193 = vadd.f32 %v75, %v192
    %194 = vmatprep.mubr.bf16.mxu0 0
    %195 = vmatmul.mubr.bf16.gmra.mrb[0].mxu0 %v123
    %v196 = vpop.f32.mrb[0].mxu0
    %v197 = vadd.f32 %v80, %v196
    %v198 = vpop.f32.mrb[0].mxu0
    %v199 = vadd.f32 %v80, %v198
    %v200 = vpop.f32.mrb[0].mxu0
    %v201 = vadd.f32 %v85, %v200
    %v202 = vpop.f32.mrb[0].mxu0
    %v203 = vadd.f32 %v85, %v202
    %204 = vdwg.mxu0
    %v205 = vmax.f32 %v167, 0.0
    %v206 = vmax.f32 %v169, 0.0
    %v207 = vmax.f32 %v171, 0.0
    %v208 = vmax.f32 %v173, 0.0
    %v209 = vmax.f32 %v177, 0.0
    %v210 = vmax.f32 %v179, 0.0
    %v211 = vmax.f32 %v181, 0.0
    %v212 = vmax.f32 %v183, 0.0
    %v213 = vmax.f32 %v187, 0.0
    %v214 = vmax.f32 %v189, 0.0
    %v215 = vmax.f32 %v191, 0.0
    %v216 = vmax.f32 %v193, 0.0
    %v217 = vmax.f32 %v197, 0.0
    %v218 = vmax.f32 %v199, 0.0
    %v219 = vmax.f32 %v201, 0.0
    %v220 = vmax.f32 %v203, 0.0
    %v221 = vld [vmem:[%s3] sm:$0xf]
    %v222 = vld [vmem:[%s3 + $0x4] sm:$0xf]
    %v223 = vld [vmem:[%s3 + $0x8] sm:$0xf]
    %v224 = vld [vmem:[%s3 + $0xc] sm:$0xf]
    %v225 = vld [vmem:[%s3 + $0x10] sm:$0xf]
    %v226 = vld [vmem:[%s3 + $0x14] sm:$0xf]
    %v227 = vld [vmem:[%s3 + $0x18] sm:$0xf]
    %v228 = vld [vmem:[%s3 + $0x1c] sm:$0xf]
    %v229 = vpack.c.bf16 %v207, %v205
    %v230 = vpack.c.bf16 %v208, %v206
    %v231 = vpack.c.bf16 %v211, %v209
    %v232 = vpack.c.bf16 %v212, %v210
    %v233 = vpack.c.bf16 %v215, %v213
    %v234 = vpack.c.bf16 %v216, %v214
    %v235 = vpack.c.bf16 %v219, %v217
    %v236 = vpack.c.bf16 %v220, %v218
    %v237 = vld [vmem:[%s4] sm:$0xff]
    %v238 = vld [vmem:[%s4 + $0x8] sm:$0xff]
    %v239 = vld [vmem:[%s4 + $0x10] sm:$0xff]
    %v240 = vld [vmem:[%s4 + $0x18] sm:$0xff]
    %v241 = vld [vmem:[%s4 + $0x20] sm:$0xff]
    %v242 = vld [vmem:[%s4 + $0x28] sm:$0xff]
    %v243 = vld [vmem:[%s4 + $0x30] sm:$0xff]
    %v244 = vld [vmem:[%s4 + $0x38] sm:$0xff]
    %246 = vset.pattern.permute.xlu0 0
    %247 = vperm.xlu0 %246, %v237
    %v248 = vpop.permute.xlu0 %247
    %251 = vset.pattern.permute.xlu0 0
    %252 = vperm.xlu0 %251, %v238
    %v253 = vpop.permute.xlu0 %252
    %256 = vset.pattern.permute.xlu0 0
    %257 = vperm.xlu0 %256, %v239
    %v258 = vpop.permute.xlu0 %257
    %261 = vset.pattern.permute.xlu0 0
    %262 = vperm.xlu0 %261, %v240
    %v263 = vpop.permute.xlu0 %262
    %266 = vset.pattern.permute.xlu0 0
    %267 = vperm.xlu0 %266, %v241
    %v268 = vpop.permute.xlu0 %267
    %271 = vset.pattern.permute.xlu0 0
    %272 = vperm.xlu0 %271, %v242
    %v273 = vpop.permute.xlu0 %272
    %276 = vset.pattern.permute.xlu0 0
    %277 = vperm.xlu0 %276, %v243
    %v278 = vpop.permute.xlu0 %277
    %281 = vset.pattern.permute.xlu0 0
    %282 = vperm.xlu0 %281, %v244
    %v283 = vpop.permute.xlu0 %282
    %v293 = vunpack.c.l.b16 %v221
    %v294 = vunpack.c.l.b16 %v222
    %v295 = vunpack.c.l.b16 %v223
    %v296 = vunpack.c.l.b16 %v224
    %v297 = vunpack.c.l.b16 %v225
    %v298 = vunpack.c.l.b16 %v226
    %v299 = vunpack.c.l.b16 %v227
    %v300 = vunpack.c.l.b16 %v228
    %v301 = vpack.c.b16 %v294, %v293
    %v302 = vpack.c.b16 %v296, %v295
    %v303 = vpack.c.b16 %v298, %v297
    %v304 = vpack.c.b16 %v300, %v299
    %vm305 = vcmask 523264
    %v307 = vsel %vm305, %v301, 0
    %v310 = vsel %vm305, %v302, 0
    %v313 = vsel %vm305, %v303, 0
    %v316 = vsel %vm305, %v304, 0
    %318 = vmatprep.subr.bf16.mxu0 %v230
    %319 = vmatpush1.bf16.msra.mxu0 %v229
    %320 = vmatprep.subr.bf16.mxu0 %v232
    %321 = vmatpush1.bf16.msra.mxu0 %v231
    %322 = vmatprep.subr.bf16.mxu0 %v234
    %323 = vmatpush1.bf16.msra.mxu0 %v233
    %324 = vmatprep.subr.bf16.mxu0 %v236
    %325 = vmatpush1.bf16.msra.mxu0 %v235
    %326 = vmatprep.subr.bf16.mxu0 0
    %327 = vmatpush1.bf16.msra.mxu0 0
    %328 = vmatprep.subr.bf16.mxu0 0
    %329 = vmatpush1.bf16.msra.mxu0 0
    %330 = vmatprep.subr.bf16.mxu0 0
    %331 = vmatpush1.bf16.msra.mxu0 0
    %332 = vmatprep.subr.bf16.mxu0 0
    %333 = vmatpush1.bf16.msra.mxu0 0
    %334 = vmatprep.subr.bf16.mxu0 0
    %335 = vmatpush1.bf16.msra.mxu0 0
    %336 = vmatprep.subr.bf16.mxu0 0
    %337 = vmatpush1.bf16.msra.mxu0 0
    %338 = vmatprep.subr.bf16.mxu0 0
    %339 = vmatpush1.bf16.msra.mxu0 0
    %340 = vmatprep.subr.bf16.mxu0 0
    %341 = vmatpush1.bf16.msra.mxu0 0
    %342 = vmatprep.subr.bf16.mxu0 0
    %343 = vmatpush1.bf16.msra.mxu0 0
    %344 = vmatprep.subr.bf16.mxu0 0
    %345 = vmatpush1.bf16.msra.mxu0 0
    %346 = vmatprep.subr.bf16.mxu0 0
    %347 = vmatpush1.bf16.msra.mxu0 0
    %348 = vmatprep.subr.bf16.mxu0 0
    %349 = vmatpush1.bf16.msra.mxu0 0
    %350 = vmatprep.mubr.bf16.mxu0 0
    %351 = vmatmul.mubr.bf16.gmra.mrb[0].mxu0 %v307
    %v352 = vpop.f32.mrb[0].mxu0
    %v353 = vadd.f32 %v248, %v352
    %v354 = vpop.f32.mrb[0].mxu0
    %v355 = vadd.f32 %v248, %v354
    %v356 = vpop.f32.mrb[0].mxu0
    %v357 = vadd.f32 %v253, %v356
    %v358 = vpop.f32.mrb[0].mxu0
    %v359 = vadd.f32 %v253, %v358
    %360 = vmatprep.mubr.bf16.mxu0 0
    %361 = vmatmul.mubr.bf16.gmra.mrb[0].mxu0 %v310
    %v362 = vpop.f32.mrb[0].mxu0
    %v363 = vadd.f32 %v258, %v362
    %v364 = vpop.f32.mrb[0].mxu0
    %v365 = vadd.f32 %v258, %v364
    %v366 = vpop.f32.mrb[0].mxu0
    %v367 = vadd.f32 %v263, %v366
    %v368 = vpop.f32.mrb[0].mxu0
    %v369 = vadd.f32 %v263, %v368
    %370 = vmatprep.mubr.bf16.mxu0 0
    %371 = vmatmul.mubr.bf16.gmra.mrb[0].mxu0 %v313
    %v372 = vpop.f32.mrb[0].mxu0
    %v373 = vadd.f32 %v268, %v372
    %v374 = vpop.f32.mrb[0].mxu0
    %v375 = vadd.f32 %v268, %v374
    %v376 = vpop.f32.mrb[0].mxu0
    %v377 = vadd.f32 %v273, %v376
    %v378 = vpop.f32.mrb[0].mxu0
    %v379 = vadd.f32 %v273, %v378
    %380 = vmatprep.mubr.bf16.mxu0 0
    %381 = vmatmul.mubr.bf16.gmra.mrb[0].mxu0 %v316
    %v382 = vpop.f32.mrb[0].mxu0
    %v383 = vadd.f32 %v278, %v382
    %v384 = vpop.f32.mrb[0].mxu0
    %v385 = vadd.f32 %v278, %v384
    %v386 = vpop.f32.mrb[0].mxu0
    %v387 = vadd.f32 %v283, %v386
    %v388 = vpop.f32.mrb[0].mxu0
    %v389 = vadd.f32 %v283, %v388
    %390 = vdwg.mxu0
    %v391 = vmax.f32 %v353, 0.0
    %v392 = vmax.f32 %v355, 0.0
    %v393 = vmax.f32 %v357, 0.0
    %v394 = vmax.f32 %v359, 0.0
    %v395 = vmax.f32 %v363, 0.0
    %v396 = vmax.f32 %v365, 0.0
    %v397 = vmax.f32 %v367, 0.0
    %v398 = vmax.f32 %v369, 0.0
    %v399 = vmax.f32 %v373, 0.0
    %v400 = vmax.f32 %v375, 0.0
    %v401 = vmax.f32 %v377, 0.0
    %v402 = vmax.f32 %v379, 0.0
    %v403 = vmax.f32 %v383, 0.0
    %v404 = vmax.f32 %v385, 0.0
    %v405 = vmax.f32 %v387, 0.0
    %v406 = vmax.f32 %v389, 0.0
    %v407 = vld [vmem:[%s5] sm:$0xff]
    %v408 = vld [vmem:[%s5 + $0x8] sm:$0xff]
    %v409 = vld [vmem:[%s5 + $0x10] sm:$0xff]
    %v410 = vld [vmem:[%s5 + $0x18] sm:$0xff]
    %v411 = vld [vmem:[%s5 + $0x20] sm:$0xff]
    %v412 = vld [vmem:[%s5 + $0x28] sm:$0xff]
    %v413 = vld [vmem:[%s5 + $0x30] sm:$0xff]
    %v414 = vld [vmem:[%s5 + $0x38] sm:$0xff]
    %416 = vset.pattern.permute.xlu0 0
    %417 = vperm.xlu0 %416, %v407
    %v418 = vpop.permute.xlu0 %417
    %421 = vset.pattern.permute.xlu0 0
    %422 = vperm.xlu0 %421, %v408
    %v423 = vpop.permute.xlu0 %422
    %426 = vset.pattern.permute.xlu0 0
    %427 = vperm.xlu0 %426, %v409
    %v428 = vpop.permute.xlu0 %427
    %431 = vset.pattern.permute.xlu0 0
    %432 = vperm.xlu0 %431, %v410
    %v433 = vpop.permute.xlu0 %432
    %436 = vset.pattern.permute.xlu0 0
    %437 = vperm.xlu0 %436, %v411
    %v438 = vpop.permute.xlu0 %437
    %441 = vset.pattern.permute.xlu0 0
    %442 = vperm.xlu0 %441, %v412
    %v443 = vpop.permute.xlu0 %442
    %446 = vset.pattern.permute.xlu0 0
    %447 = vperm.xlu0 %446, %v413
    %v448 = vpop.permute.xlu0 %447
    %451 = vset.pattern.permute.xlu0 0
    %452 = vperm.xlu0 %451, %v414
    %v453 = vpop.permute.xlu0 %452
    %v455 = vmul.f32 %v391, %v418
    %v456 = vmul.f32 %v392, %v418
    %v457 = vmul.f32 %v393, %v423
    %v458 = vmul.f32 %v394, %v423
    %v459 = vmul.f32 %v395, %v428
    %v460 = vmul.f32 %v396, %v428
    %v461 = vmul.f32 %v397, %v433
    %v462 = vmul.f32 %v398, %v433
    %v463 = vmul.f32 %v399, %v438
    %v464 = vmul.f32 %v400, %v438
    %v465 = vmul.f32 %v401, %v443
    %v466 = vmul.f32 %v402, %v443
    %v467 = vmul.f32 %v403, %v448
    %v468 = vmul.f32 %v404, %v448
    %v469 = vmul.f32 %v405, %v453
    %v470 = vmul.f32 %v406, %v453
    %v471 = vadd.f32 %v455, %v457
    %v472 = vadd.f32 %v471, %v459
    %v473 = vadd.f32 %v472, %v461
    %v474 = vadd.f32 %v473, %v463
    %v475 = vadd.f32 %v474, %v465
    %v476 = vadd.f32 %v475, %v467
    %v477 = vadd.f32 %v476, %v469
    %v478 = vrot.slane %v477, 4
    %v479 = vadd.f32 %v477, %v478
    %v480 = vrot.slane %v479, 2
    %v481 = vadd.f32 %v479, %v480
    %v482 = vrot.slane %v481, 1
    %v483 = vadd.f32 %v481, %v482
    %v484 = vadd.f32 %v456, %v458
    %v485 = vadd.f32 %v484, %v460
    %v486 = vadd.f32 %v485, %v462
    %v487 = vadd.f32 %v486, %v464
    %v488 = vadd.f32 %v487, %v466
    %v489 = vadd.f32 %v488, %v468
    %v490 = vadd.f32 %v489, %v470
    %v491 = vrot.slane %v490, 4
    %v492 = vadd.f32 %v490, %v491
    %v493 = vrot.slane %v492, 2
    %v494 = vadd.f32 %v492, %v493
    %v495 = vrot.slane %v494, 1
    %v496 = vadd.f32 %v494, %v495
    %v497 = vld [vmem:[#allocation2] sm:$0x1]
    %499 = vset.pattern.permute.xlu0 0
    %500 = vperm.xlu0 %499, %v497
    %v501 = vpop.permute.xlu0 %500
    %v503 = vlaneseq
    %v504 = vshrl.u32 %v503, 7
    %v505 = vsub.s32 0, %v504
    %v506 = vrot.slane %v501, %v505
    %v507 = vadd.f32 %v483, %v506
    %v508 = vadd.f32 %v496, %v506
    %v511 = vcombine.low %v507, %v508
    %v513 = vunpack.c.l.s4 1966171168
    %v514 = vunpack.c.0.s8 %v513
    %v515 = vlaneseq
    %v516 = vshrl.u32 %v515, 7
    %v517 = vsub.s32 %v514, %v516
    %v518 = vrot.slane %v511, %v517
    %v520 = vunpack.c.l.s4 1966171168
    %v521 = vunpack.c.0.s8 %v520
    %v522 = vlaneseq
    %v523 = vshrl.u32 %v522, 7
    %v524 = vsub.s32 %v521, %v523
    %v525 = vrot.slane %v518, %v524
    %v527 = vlaneseq
    %vm528 = vcmp.ge.s32.totalorder %v527, 0
    %vm529 = vcmp.lt.s32.totalorder %v527, 256
    %vm530 = vmand %vm528, %vm529
    %531 = vst.msk [vmem:[#allocation3] sm:$0x3] %vm530, %v525
    // Predicated region
    $region30: #{linear_forward.1} parent=1 // pred_check
      _
    $region31: #{linear_forward.1} parent=1 // pred_check_branch
      %533 = sbr.rel (0) target = $region33
    $region32: #{linear_forward.1} parent=1 // pred_region
      %s535 = ssub.s32 32, 32
      %536 = vsyncadd [#allocation4], %s535
      %s538 = sshll.u32 [#allocation3], 4
      %s539 = int_to_ptr.vmem [resolvable:$true] %s538
      %541 = dma.vmem_to_hbm [thread:$0]  %s539, 32, %s7, [#allocation4]
    $region33: #{linear_forward.1} parent=1 // pred_fallthru
      _
    // Predicated region
    $region34: #{linear_forward.1} parent=1 // pred_check
      _
    $region35: #{linear_forward.1} parent=1 // pred_check_branch
      %543 = sbr.rel (0) target = $region37
    $region36: #{linear_forward.1} parent=1 // pred_region
      %544 = dma.done [#allocation4], 32
    $region37: #{linear_forward.1} parent=1 // pred_fallthru
      _
    %545 = vsyncpa [#allocation4], 1

</llo_original>
